<compile_context>
chip_gen: v5e
topology: v5e:2x2
jax: 0.10.0
libtpu: 0.0.40
codegen_flags: <defaults>
</compile_context>

<pallas_src>
import functools

import jax
import jax.numpy as jnp
from jax.experimental import pallas as pl
from jax.experimental.pallas import tpu as pltpu

BF16 = jnp.bfloat16
F32 = jnp.float32


# ---------------------------------------------------------------------------
# Kernel 1: fused QKV projection (row-tiled GEMM, bf16 operands, f32 accum).
# ---------------------------------------------------------------------------
def _qkv_kernel(x_ref, wq_ref, wk_ref, wv_ref, bq_ref, bk_ref, bv_ref,
                q_ref, k_ref, v_ref):
    x = x_ref[...].astype(BF16)
    q_ref[...] = (jnp.dot(x, wq_ref[...], preferred_element_type=jnp.float32)
                  + bq_ref[...]).astype(q_ref.dtype)
    k_ref[...] = (jnp.dot(x, wk_ref[...], preferred_element_type=jnp.float32)
                  + bk_ref[...]).astype(k_ref.dtype)
    v_ref[...] = (jnp.dot(x, wv_ref[...], preferred_element_type=jnp.float32)
                  + bv_ref[...]).astype(v_ref.dtype)


# ---------------------------------------------------------------------------
# Kernel 2: per-(batch, q_tile, head_group) attention.
#   Q/K/V/ctx live in (B*S, D) layout; per head-group lane column blocks.
# ---------------------------------------------------------------------------
def _attention_kernel(hm_ref, q_ref, k_ref, v_ref, mask_ref, *out_refs,
                      hg, hd, output_probs):
    ctx_ref = out_refs[0]
    h = pl.program_id(2)            # head-group index

    q = q_ref[...]                  # (tq, hg*hd) bf16, 1/sqrt(hd) folded into Wq
    k = k_ref[...]                  # (S,  hg*hd) bf16
    v = v_ref[...]                  # (S,  hg*hd) bf16
    m = mask_ref[0, 0]              # (tq, S) f32 additive mask (resident over h)

    for j in range(hg):             # static unroll over heads in the group
        lo, hi = j * hd, (j + 1) * hd
        qj = q[:, lo:hi]
        kj = k[:, lo:hi]
        vj = v[:, lo:hi]

        # scores = qj @ kj^T (contract last dims, no transpose materialized)
        s = jax.lax.dot_general(qj, kj, (((1,), (1,)), ((), ())),
                                preferred_element_type=jnp.float32) + m
        s = s - jnp.max(s, axis=-1, keepdims=True)
        e = jnp.exp(s)
        p = e * pl.reciprocal(jnp.sum(e, axis=-1, keepdims=True), approx=True)
        p = p * hm_ref[h * hg + j]  # post-softmax per-head mask (SMEM scalar)

        if output_probs:
            out_refs[1][0, j] = p   # (tq, S) lane-dense slab

        ctx_ref[:, lo:hi] = jnp.dot(
            p.astype(v.dtype), vj,
            preferred_element_type=jnp.float32).astype(ctx_ref.dtype)


# ---------------------------------------------------------------------------
# Kernel 3: out-proj + residual + LN1 + F-tiled FFN + residual + LN2.
# ---------------------------------------------------------------------------
def _mlp_kernel(ctx_ref, res_ref, wo_ref, bo_ref, ln1w_ref, ln1b_ref,
                w1_ref, b1_ref, w2_ref, b2_ref, ln2w_ref, ln2b_ref,
                out_ref, h1n_ref, acc_ref):
    f = pl.program_id(1)

    @pl.when(f == 0)
    def _init():
        attn = jnp.dot(ctx_ref[...], wo_ref[...],
                       preferred_element_type=jnp.float32) + bo_ref[...]
        h1 = res_ref[...] + attn
        mu = jnp.mean(h1, axis=-1, keepdims=True)
        var = jnp.mean((h1 - mu) ** 2, axis=-1, keepdims=True)
        h1n_ref[...] = ((h1 - mu) * jax.lax.rsqrt(var + 1e-5)
                        * ln1w_ref[...] + ln1b_ref[...])
        acc_ref[...] = jnp.zeros_like(acc_ref)

    # F-tiled FFN: acc += gelu(h1n @ W1^T[:, f] + b1[f]) @ W2^T[f, :]
    g = jnp.dot(h1n_ref[...].astype(BF16), w1_ref[...],
                preferred_element_type=jnp.float32) + b1_ref[...]
    g = jax.nn.gelu(g, approximate=False)       # exact GELU (torch default)
    acc_ref[...] += jnp.dot(g.astype(BF16), w2_ref[...],
                            preferred_element_type=jnp.float32)

    @pl.when(f == pl.num_programs(1) - 1)
    def _finalize():
        h2 = h1n_ref[...] + acc_ref[...] + b2_ref[...]
        mu = jnp.mean(h2, axis=-1, keepdims=True)
        var = jnp.mean((h2 - mu) ** 2, axis=-1, keepdims=True)
        out_ref[...] = ((h2 - mu) * jax.lax.rsqrt(var + 1e-5)
                        * ln2w_ref[...] + ln2b_ref[...])


def _pick_tile(full, target, align):
    t = min(target, full)
    if t % align != 0 or full % t != 0:
        return full                  # full-extent block is always legal
    return t


def _pick_head_group(num_heads, head_dim):
    # Smallest head group whose lane width is a multiple of 128 (unmasked
    # stores, better MXU columns); fall back to all heads (= full D block).
    for g in range(1, num_heads + 1):
        if num_heads % g == 0 and (g * head_dim) % 128 == 0:
            return g
    return num_heads


def bart_encoder_layer(hidden, attention_mask, layer_head_mask, params,
                       num_heads, *, output_attentions=False,
                       row_tile=512, q_tile=256, f_tile=1024,
                       vmem_limit_bytes=None):
    # Tile defaults target v6e (128 MiB VMEM); on v5e / v7x use smaller
    # row/f tiles and/or set vmem_limit_bytes to stay inside scoped VMEM.
    B, S, D = hidden.shape
    H = num_heads
    assert D % H == 0
    hd = D // H
    F = params["w1"].shape[0]
    N = B * S
    assert S % 8 == 0, "sequence length must be a multiple of 8"

    tr = _pick_tile(N, row_tile, 8)       # row tile for GEMM/FFN kernels
    tq = _pick_tile(S, q_tile, 8)         # query tile for attention
    tf = _pick_tile(F, f_tile, 128)       # FFN inner-dim tile (lane aligned)
    hg = _pick_head_group(H, hd)          # heads per attention grid step
    n_qt = S // tq
    n_hg = H // hg

    scaling = hd ** -0.5
    # Host-side packing: fold the q scaling into Wq/bq, pre-transpose, bf16.
    wq_t = (params["wq"] * scaling).T.astype(BF16)          # (D, D)
    wk_t = params["wk"].T.astype(BF16)
    wv_t = params["wv"].T.astype(BF16)
    bq = (params["bq"] * scaling).reshape(1, D).astype(F32)
    bk = params["bk"].reshape(1, D).astype(F32)
    bv = params["bv"].reshape(1, D).astype(F32)
    wo_t = params["wo"].T.astype(BF16)                      # (D, D)
    w1_t = params["w1"].T.astype(BF16)                      # (D, F)
    w2_t = params["w2"].T.astype(BF16)                      # (F, D)

    x2d = hidden.astype(F32).reshape(N, D)

    def cparams(sem):
        return pltpu.CompilerParams(dimension_semantics=sem,
                                    vmem_limit_bytes=vmem_limit_bytes)

    # ---- 1) fused QKV projection -> three (N, D) bf16 arrays ----------------
    q2d, k2d, v2d = pl.pallas_call(
        _qkv_kernel,
        out_shape=tuple(jax.ShapeDtypeStruct((N, D), BF16) for _ in range(3)),
        grid_spec=pltpu.PrefetchScalarGridSpec(
            num_scalar_prefetch=0,
            grid=(N // tr,),
            in_specs=[
                pl.BlockSpec((tr, D), lambda r: (r, 0)),
                pl.BlockSpec((D, D), lambda r: (0, 0)),
                pl.BlockSpec((D, D), lambda r: (0, 0)),
                pl.BlockSpec((D, D), lambda r: (0, 0)),
                pl.BlockSpec((1, D), lambda r: (0, 0)),
                pl.BlockSpec((1, D), lambda r: (0, 0)),
                pl.BlockSpec((1, D), lambda r: (0, 0)),
            ],
            out_specs=tuple(pl.BlockSpec((tr, D), lambda r: (r, 0))
                            for _ in range(3)),
        ),
        compiler_params=cparams(("parallel",)),
    )(x2d, wq_t, wk_t, wv_t, bq, bk, bv)

    # ---- 2) attention: grid (B, q_tile, head_group), head axis innermost ----
    attn_kernel = functools.partial(_attention_kernel, hg=hg, hd=hd,
                                    output_probs=output_attentions)
    out_shape = [jax.ShapeDtypeStruct((N, D), BF16)]          # ctx in (N,D)
    out_specs = [pl.BlockSpec((tq, hg * hd),
                              lambda b, qi, h, hm: (b * n_qt + qi, h))]
    if output_attentions:
        out_shape.append(jax.ShapeDtypeStruct((B, H, S, S), F32))
        out_specs.append(pl.BlockSpec((1, hg, tq, S),
                                      lambda b, qi, h, hm: (b, h, qi, 0)))

    attn_res = pl.pallas_call(
        attn_kernel,
        out_shape=tuple(out_shape),
        grid_spec=pltpu.PrefetchScalarGridSpec(
            num_scalar_prefetch=1,            # layer_head_mask -> SMEM scalars
            grid=(B, n_qt, n_hg),
            in_specs=[
                pl.BlockSpec((tq, hg * hd),
                             lambda b, qi, h, hm: (b * n_qt + qi, h)),   # Q
                pl.BlockSpec((S, hg * hd),
                             lambda b, qi, h, hm: (b, h)),               # K
                pl.BlockSpec((S, hg * hd),
                             lambda b, qi, h, hm: (b, h)),               # V
                pl.BlockSpec((1, 1, tq, S),
                             lambda b, qi, h, hm: (b, 0, qi, 0)),        # mask
            ],
            out_specs=tuple(out_specs),
        ),
        compiler_params=cparams(("parallel", "parallel", "parallel")),
    )(layer_head_mask.astype(F32), q2d, k2d, v2d, attention_mask.astype(F32))

    ctx2d = attn_res[0]                       # (N, D) bf16, already MLP layout
    attn_probs = attn_res[1] if output_attentions else None

    # ---- 3) out-proj + LN1 + F-tiled FFN + LN2 -------------------------------
    out2d = pl.pallas_call(
        _mlp_kernel,
        out_shape=jax.ShapeDtypeStruct((N, D), F32),
        grid_spec=pltpu.PrefetchScalarGridSpec(
            num_scalar_prefetch=0,
            grid=(N // tr, F // tf),
            in_specs=[
                pl.BlockSpec((tr, D), lambda r, f: (r, 0)),    # attention ctx
                pl.BlockSpec((tr, D), lambda r, f: (r, 0)),    # residual input
                pl.BlockSpec((D, D), lambda r, f: (0, 0)),     # Wo^T (bf16)
                pl.BlockSpec((1, D), lambda r, f: (0, 0)),     # bo
                pl.BlockSpec((1, D), lambda r, f: (0, 0)),     # ln1 gamma
                pl.BlockSpec((1, D), lambda r, f: (0, 0)),     # ln1 beta
                pl.BlockSpec((D, tf), lambda r, f: (0, f)),    # W1^T f-tile
                pl.BlockSpec((1, tf), lambda r, f: (0, f)),    # b1 f-tile
                pl.BlockSpec((tf, D), lambda r, f: (f, 0)),    # W2^T f-tile
                pl.BlockSpec((1, D), lambda r, f: (0, 0)),     # b2
                pl.BlockSpec((1, D), lambda r, f: (0, 0)),     # ln2 gamma
                pl.BlockSpec((1, D), lambda r, f: (0, 0)),     # ln2 beta
            ],
            out_specs=pl.BlockSpec((tr, D), lambda r, f: (r, 0)),
            scratch_shapes=[pltpu.VMEM((tr, D), F32),          # LN1 output
                            pltpu.VMEM((tr, D), F32)],         # FFN accumulator
        ),
        compiler_params=cparams(("parallel", "arbitrary")),
    )(ctx2d, x2d,
      wo_t, params["bo"].reshape(1, D).astype(F32),
      params["ln1_w"].reshape(1, D).astype(F32),
      params["ln1_b"].reshape(1, D).astype(F32),
      w1_t, params["b1"].reshape(1, F).astype(F32),
      w2_t, params["b2"].reshape(1, D).astype(F32),
      params["ln2_w"].reshape(1, D).astype(F32),
      params["ln2_b"].reshape(1, D).astype(F32))

    out = out2d.reshape(B, S, D)
    return (out, attn_probs) if output_attentions else (out,)


def ref_layer(hidden, attention_mask, layer_head_mask, p, num_heads):
    """Pure-JAX f32 reference mirroring the PyTorch forward (eval mode)."""
    B, S, D = hidden.shape
    H = num_heads
    hd = D // H
    q = (hidden @ p["wq"].T + p["bq"]) * hd ** -0.5
    k = hidden @ p["wk"].T + p["bk"]
    v = hidden @ p["wv"].T + p["bv"]

    def split(x):
        return x.reshape(B, S, H, hd).transpose(0, 2, 1, 3)

    qh, kh, vh = split(q), split(k), split(v)
    sc = jnp.einsum("bhqd,bhkd->bhqk", qh, kh) + attention_mask
    attn = jax.nn.softmax(sc, axis=-1) * layer_head_mask[None, :, None, None]
    ctx = jnp.einsum("bhqk,bhkd->bhqd", attn, vh).transpose(0, 2, 1, 3).reshape(B, S, D)
    a = ctx @ p["wo"].T + p["bo"]

    def ln(x, g, b):
        mu = x.mean(-1, keepdims=True)
        var = ((x - mu) ** 2).mean(-1, keepdims=True)
        return (x - mu) / jnp.sqrt(var + 1e-5) * g + b

    h1 = ln(hidden + a, p["ln1_w"], p["ln1_b"])
    f = jax.nn.gelu(h1 @ p["w1"].T + p["b1"], approximate=False)
    f = f @ p["w2"].T + p["b2"]
    out = ln(h1 + f, p["ln2_w"], p["ln2_b"])
    return out, attn


if __name__ == "__main__":
    # Small BART-like config: d_model=64, heads=4, ffn=256, seq=128, batch=2.
    B, S, D, H, F = 2, 128, 64, 4, 256

    key = jax.random.PRNGKey(0)
    ks = jax.random.split(key, 24)

    def w(kk, shape, scale=0.02):
        return (scale * jax.random.normal(kk, shape)).astype(jnp.float32)

    params = {
        "wq": w(ks[0], (D, D)), "bq": w(ks[1], (D,)),
        "wk": w(ks[2], (D, D)), "bk": w(ks[3], (D,)),
        "wv": w(ks[4], (D, D)), "bv": w(ks[5], (D,)),
        "wo": w(ks[6], (D, D)), "bo": w(ks[7], (D,)),
        "ln1_w": 1.0 + w(ks[8], (D,), 0.1), "ln1_b": w(ks[9], (D,), 0.1),
        "w1": w(ks[10], (F, D)), "b1": w(ks[11], (F,)),
        "w2": w(ks[12], (D, F)), "b2": w(ks[13], (D,)),
        "ln2_w": 1.0 + w(ks[14], (D,), 0.1), "ln2_b": w(ks[15], (D,), 0.1),
    }

    hidden = jax.random.normal(ks[16], (B, S, D), dtype=jnp.float32)
    # Additive attention mask: batch 1 has its last 16 key positions masked.
    mask = jnp.zeros((B, 1, S, S), jnp.float32)
    mask = mask.at[1, 0, :, S - 16:].set(-1e9)
    layer_head_mask = jnp.array([1.0, 0.0, 0.5, 1.0], dtype=jnp.float32)

    out, attn = bart_encoder_layer(
        hidden, mask, layer_head_mask, params, H,
        output_attentions=True, row_tile=128, q_tile=64, f_tile=128)
    jax.block_until_ready(out)
    jax.block_until_ready(attn)

    ref_out, ref_attn = ref_layer(hidden, mask, layer_head_mask, params, H)
    assert out.shape == (B, S, D) and attn.shape == (B, H, S, S)
    # bf16 matmul operands + approx reciprocal -> relaxed tolerances vs f32 ref.
    assert jnp.allclose(out, ref_out, atol=2e-2, rtol=2e-2), "output mismatch"
    assert jnp.allclose(attn, ref_attn, atol=3e-3, rtol=1e-2), "attention mismatch"

    print("KERNEL_OK")
</pallas_src>

<mosaic_0001>
module attributes {stable_mosaic.version = 11 : i64} {
  func.func @_qkv_kernel(%arg0: i32, %arg1: memref<128x64xf32, #tpu.memory_space<vmem>>, %arg2: memref<64x64xbf16, #tpu.memory_space<vmem>>, %arg3: memref<64x64xbf16, #tpu.memory_space<vmem>>, %arg4: memref<64x64xbf16, #tpu.memory_space<vmem>>, %arg5: memref<1x64xf32, #tpu.memory_space<vmem>>, %arg6: memref<1x64xf32, #tpu.memory_space<vmem>>, %arg7: memref<1x64xf32, #tpu.memory_space<vmem>>, %arg8: memref<128x64xbf16, #tpu.memory_space<vmem>>, %arg9: memref<128x64xbf16, #tpu.memory_space<vmem>>, %arg10: memref<128x64xbf16, #tpu.memory_space<vmem>>) attributes {dimension_semantics = [#tpu.dimension_semantics<parallel>], iteration_bounds = array<i64: 2>, scalar_prefetch = 0 : i64, scratch_operands = 0 : i64, tpu.core_type = #tpu.core_type<tc>, window_params = [{transform_indices = @transform_0, window_bounds = array<i64: 128, 64>}, {pipeline_mode = #tpu.pipeline_mode<synchronous>, transform_indices = @transform_1, window_bounds = array<i64: 64, 64>}, {pipeline_mode = #tpu.pipeline_mode<synchronous>, transform_indices = @transform_2, window_bounds = array<i64: 64, 64>}, {pipeline_mode = #tpu.pipeline_mode<synchronous>, transform_indices = @transform_3, window_bounds = array<i64: 64, 64>}, {pipeline_mode = #tpu.pipeline_mode<synchronous>, transform_indices = @transform_4, window_bounds = array<i64: 1, 64>}, {pipeline_mode = #tpu.pipeline_mode<synchronous>, transform_indices = @transform_5, window_bounds = array<i64: 1, 64>}, {pipeline_mode = #tpu.pipeline_mode<synchronous>, transform_indices = @transform_6, window_bounds = array<i64: 1, 64>}, {transform_indices = @transform_7, window_bounds = array<i64: 128, 64>}, {transform_indices = @transform_8, window_bounds = array<i64: 128, 64>}, {transform_indices = @transform_9, window_bounds = array<i64: 128, 64>}]} {
    %c0 = arith.constant 0 : index
    %c0_0 = arith.constant 0 : index
    %0 = vector.load %arg1[%c0, %c0_0] : memref<128x64xf32, #tpu.memory_space<vmem>>, vector<128x64xf32>
    %1 = arith.truncf %0 : vector<128x64xf32> to vector<128x64xbf16>
    %c0_1 = arith.constant 0 : index
    %c0_2 = arith.constant 0 : index
    %2 = vector.load %arg2[%c0_1, %c0_2] : memref<64x64xbf16, #tpu.memory_space<vmem>>, vector<64x64xbf16>
    %cst = arith.constant dense<0.000000e+00> : vector<128x64xf32>
    %3 = tpu.matmul %1, %2, %cst {dimension_numbers = #tpu.dot_dimension_numbers<[1], [0], [0], [1], [0, 0, 1, 1], [], []>} : vector<128x64xbf16>, vector<64x64xbf16>, vector<128x64xf32> -> vector<128x64xf32>
    %c0_3 = arith.constant 0 : index
    %c0_4 = arith.constant 0 : index
    %4 = vector.load %arg5[%c0_3, %c0_4] : memref<1x64xf32, #tpu.memory_space<vmem>>, vector<1x64xf32>
    %5 = vector.broadcast %4 : vector<1x64xf32> to vector<128x64xf32>
    %6 = arith.addf %3, %5 : vector<128x64xf32>
    %7 = arith.truncf %6 : vector<128x64xf32> to vector<128x64xbf16>
    %c0_5 = arith.constant 0 : index
    %c0_6 = arith.constant 0 : index
    %8 = vector.load %arg8[%c0_5, %c0_6] : memref<128x64xbf16, #tpu.memory_space<vmem>>, vector<128x64xbf16>
    tpu.vector_store %arg8[%c0_5, %c0_6], %7 {strides = array<i32>} : memref<128x64xbf16, #tpu.memory_space<vmem>>, vector<128x64xbf16>,
    %c0_7 = arith.constant 0 : index
    %c0_8 = arith.constant 0 : index
    %9 = vector.load %arg3[%c0_7, %c0_8] : memref<64x64xbf16, #tpu.memory_space<vmem>>, vector<64x64xbf16>
    %cst_9 = arith.constant dense<0.000000e+00> : vector<128x64xf32>
    %10 = tpu.matmul %1, %9, %cst_9 {dimension_numbers = #tpu.dot_dimension_numbers<[1], [0], [0], [1], [0, 0, 1, 1], [], []>} : vector<128x64xbf16>, vector<64x64xbf16>, vector<128x64xf32> -> vector<128x64xf32>
    %c0_10 = arith.constant 0 : index
    %c0_11 = arith.constant 0 : index
    %11 = vector.load %arg6[%c0_10, %c0_11] : memref<1x64xf32, #tpu.memory_space<vmem>>, vector<1x64xf32>
    %12 = vector.broadcast %11 : vector<1x64xf32> to vector<128x64xf32>
    %13 = arith.addf %10, %12 : vector<128x64xf32>
    %14 = arith.truncf %13 : vector<128x64xf32> to vector<128x64xbf16>
    %c0_12 = arith.constant 0 : index
    %c0_13 = arith.constant 0 : index
    %15 = vector.load %arg9[%c0_12, %c0_13] : memref<128x64xbf16, #tpu.memory_space<vmem>>, vector<128x64xbf16>
    tpu.vector_store %arg9[%c0_12, %c0_13], %14 {strides = array<i32>} : memref<128x64xbf16, #tpu.memory_space<vmem>>, vector<128x64xbf16>,
    %c0_14 = arith.constant 0 : index
    %c0_15 = arith.constant 0 : index
    %16 = vector.load %arg4[%c0_14, %c0_15] : memref<64x64xbf16, #tpu.memory_space<vmem>>, vector<64x64xbf16>
    %cst_16 = arith.constant dense<0.000000e+00> : vector<128x64xf32>
    %17 = tpu.matmul %1, %16, %cst_16 {dimension_numbers = #tpu.dot_dimension_numbers<[1], [0], [0], [1], [0, 0, 1, 1], [], []>} : vector<128x64xbf16>, vector<64x64xbf16>, vector<128x64xf32> -> vector<128x64xf32>
    %c0_17 = arith.constant 0 : index
    %c0_18 = arith.constant 0 : index
    %18 = vector.load %arg7[%c0_17, %c0_18] : memref<1x64xf32, #tpu.memory_space<vmem>>, vector<1x64xf32>
    %19 = vector.broadcast %18 : vector<1x64xf32> to vector<128x64xf32>
    %20 = arith.addf %17, %19 : vector<128x64xf32>
    %21 = arith.truncf %20 : vector<128x64xf32> to vector<128x64xbf16>
    %c0_19 = arith.constant 0 : index
    %c0_20 = arith.constant 0 : index
    %22 = vector.load %arg10[%c0_19, %c0_20] : memref<128x64xbf16, #tpu.memory_space<vmem>>, vector<128x64xbf16>
    tpu.vector_store %arg10[%c0_19, %c0_20], %21 {strides = array<i32>} : memref<128x64xbf16, #tpu.memory_space<vmem>>, vector<128x64xbf16>,
    return
  }
  func.func @transform_0(%arg0: i32) -> (i32, i32) {
    %c0_i32 = arith.constant 0 : i32
    %c0_i32_0 = arith.constant 0 : i32
    return %arg0, %c0_i32 : i32, i32
  }
  func.func @transform_1(%arg0: i32) -> (i32, i32) {
    %c0_i32 = arith.constant 0 : i32
    %c0_i32_0 = arith.constant 0 : i32
    %c0_i32_1 = arith.constant 0 : i32
    return %c0_i32, %c0_i32_0 : i32, i32
  }
  func.func @transform_2(%arg0: i32) -> (i32, i32) {
    %c0_i32 = arith.constant 0 : i32
    %c0_i32_0 = arith.constant 0 : i32
    %c0_i32_1 = arith.constant 0 : i32
    return %c0_i32, %c0_i32_0 : i32, i32
  }
  func.func @transform_3(%arg0: i32) -> (i32, i32) {
    %c0_i32 = arith.constant 0 : i32
    %c0_i32_0 = arith.constant 0 : i32
    %c0_i32_1 = arith.constant 0 : i32
    return %c0_i32, %c0_i32_0 : i32, i32
  }
  func.func @transform_4(%arg0: i32) -> (i32, i32) {
    %c0_i32 = arith.constant 0 : i32
    %c0_i32_0 = arith.constant 0 : i32
    %c0_i32_1 = arith.constant 0 : i32
    return %c0_i32, %c0_i32_0 : i32, i32
  }
  func.func @transform_5(%arg0: i32) -> (i32, i32) {
    %c0_i32 = arith.constant 0 : i32
    %c0_i32_0 = arith.constant 0 : i32
    %c0_i32_1 = arith.constant 0 : i32
    return %c0_i32, %c0_i32_0 : i32, i32
  }
  func.func @transform_6(%arg0: i32) -> (i32, i32) {
    %c0_i32 = arith.constant 0 : i32
    %c0_i32_0 = arith.constant 0 : i32
    %c0_i32_1 = arith.constant 0 : i32
    return %c0_i32, %c0_i32_0 : i32, i32
  }
  func.func @transform_7(%arg0: i32) -> (i32, i32) {
    %c0_i32 = arith.constant 0 : i32
    %c0_i32_0 = arith.constant 0 : i32
    return %arg0, %c0_i32 : i32, i32
  }
  func.func @transform_8(%arg0: i32) -> (i32, i32) {
    %c0_i32 = arith.constant 0 : i32
    %c0_i32_0 = arith.constant 0 : i32
    return %arg0, %c0_i32 : i32, i32
  }
  func.func @transform_9(%arg0: i32) -> (i32, i32) {
    %c0_i32 = arith.constant 0 : i32
    %c0_i32_0 = arith.constant 0 : i32
    return %arg0, %c0_i32 : i32, i32
  }
}

</mosaic_0001>

<llo_original>
// kernel: tpu_custom_call.1
$region0: #{tpu_custom_call.1}
  #allocation0 [shape = 'u32[]', space=smem, size = 0x4, offset = 0x4, fixed_abs, tag = 'smem constant byte address 0x4 - core index']
  #allocation1 [shape = 'u32[72,128]{1,0:T(1,128)}', space=vmem, size = 0x9000, scoped, tag = 'internal scratch']
  %s0 = inlined_call_operand.vmem [shape: f32[256,64], index: 0, kind: input, shape index: {}]
  %s1 = inlined_call_operand.vmem [shape: bf16[64,64], index: 1, kind: input, shape index: {}]
  %s2 = inlined_call_operand.vmem [shape: bf16[64,64], index: 2, kind: input, shape index: {}]
  %s3 = inlined_call_operand.vmem [shape: bf16[64,64], index: 3, kind: input, shape index: {}]
  %s4 = inlined_call_operand.vmem [shape: f32[1,64], index: 4, kind: input, shape index: {}]
  %s5 = inlined_call_operand.vmem [shape: f32[1,64], index: 5, kind: input, shape index: {}]
  %s6 = inlined_call_operand.vmem [shape: f32[1,64], index: 6, kind: input, shape index: {}]
  %s7 = inlined_call_operand.vmem [shape: bf16[256,64], index: 7, kind: output, shape index: {0}]
  %s8 = inlined_call_operand.vmem [shape: bf16[256,64], index: 8, kind: output, shape index: {1}]
  %s9 = inlined_call_operand.vmem [shape: bf16[256,64], index: 9, kind: output, shape index: {2}]
  %10 = xla_tuple %s7, %s8, %s9
  %s11 = sld [smem:[#allocation0]]
  $region77: #{tpu_custom_call.1} parent=0
    _
  %s13 = ssub.s32 1, %s11
  %s14 = scalar_select 0, %s13, %s11
  loop: start=0, step=1, limit=4
  $region2: #{tpu_custom_call.1} parent=0 // loop_pre_header
    _
  $region3: #{tpu_custom_call.1} parent=0 // loop_header
    %s16 = sphi 0, %s20
    %p17 = scmp.ge.s32.totalorder %s16, 4
    %s26 = sphi 0, %s28
    %s29 = sphi 0, %s26
    %s30 = sphi 0, %s29
    %s46 = sphi 0, %s30
    %s50 = sphi 0, %s50
    %s52 = sphi 0, %s50
    %s53 = sphi 0, %s52
    %s67 = sphi 0, %s53
    %s71 = sphi 0, %s71
    %s73 = sphi 0, %s71
    %s74 = sphi 0, %s73
    %s88 = sphi 0, %s74
    %s92 = sphi 0, %s92
    %s94 = sphi 0, %s92
    %s95 = sphi 0, %s94
    %s109 = sphi 0, %s95
    %s113 = sphi 0, %s113
    %s115 = sphi 0, %s113
    %s116 = sphi 0, %s115
    %s130 = sphi 0, %s116
    %s134 = sphi 0, %s134
    %s136 = sphi 0, %s134
    %s137 = sphi 0, %s136
    %s151 = sphi 0, %s137
    %s155 = sphi 0, %s155
    %s157 = sphi 0, %s155
    %s158 = sphi 0, %s157
    %s172 = sphi 0, %s158
    %s178 = sphi 0, %s180
    %s181 = sphi 0, %s178
    %s182 = sphi 0, %s181
    %s198 = sphi 0, %s182
    %s204 = sphi 0, %s206
    %s207 = sphi 0, %s204
    %s208 = sphi 0, %s207
    %s224 = sphi 0, %s208
    %s230 = sphi 0, %s232
    %s233 = sphi 0, %s230
    %s234 = sphi 0, %s233
    %s250 = sphi 0, %s234
  $region4: #{tpu_custom_call.1} parent=0 // loop_header_branch
    %19 = sbr.rel (%p17) target = $region8
  $region5: #{tpu_custom_call.1} parent=0 // loop_body
    %s21 = ssub.s32 %s16, 1
    %s22 = ssub.s32 %s16, 2
    %s23 = sadd.s32 %s16, 1
    %s24 = ssub.s32 %s16, %s23
    %p25 = scmp.eq.s32.totalorder %s24, 0
    %s27 = sadd.s32 %s26, 1
    %s28 = scalar_select %p25, %s26, %s27
    %p31 = pneg %p25
    %p32 = scmp.eq.s32.totalorder %s16, 1
    %p33 = por %p31, %p32
    %p34 = scmp.ne.s32.totalorder %s26, %s29
    %p35 = scmp.eq.s32.totalorder %s16, 0
    %p36 = por %p34, %p35
    %p37 = scmp.ne.s32.totalorder %s26, %s29
    %p38 = scmp.eq.s32.totalorder %s21, 1
    %p39 = por %p37, %p38
    %p40 = scmp.ne.s32.totalorder %s29, %s30
    %p41 = scmp.eq.s32.totalorder %s21, 0
    %p42 = por %p40, %p41
    %p43 = scmp.ne.s32.totalorder %s29, %s30
    %p44 = scmp.eq.s32.totalorder %s22, 1
    %p45 = por %p43, %p44
    %p47 = scmp.ne.s32.totalorder %s30, %s46
    %p48 = scmp.eq.s32.totalorder %s22, 0
    %p49 = por %p47, %p48
    %s51 = sadd.s32 %s50, 1
    %p54 = scmp.eq.s32.totalorder %s16, 1
    %p55 = scmp.ne.s32.totalorder %s50, %s52
    %p56 = scmp.eq.s32.totalorder %s16, 0
    %p57 = por %p55, %p56
    %p58 = scmp.ne.s32.totalorder %s50, %s52
    %p59 = scmp.eq.s32.totalorder %s21, 1
    %p60 = por %p58, %p59
    %p61 = scmp.ne.s32.totalorder %s52, %s53
    %p62 = scmp.eq.s32.totalorder %s21, 0
    %p63 = por %p61, %p62
    %p64 = scmp.ne.s32.totalorder %s52, %s53
    %p65 = scmp.eq.s32.totalorder %s22, 1
    %p66 = por %p64, %p65
    %p68 = scmp.ne.s32.totalorder %s53, %s67
    %p69 = scmp.eq.s32.totalorder %s22, 0
    %p70 = por %p68, %p69
    %s72 = sadd.s32 %s71, 1
    %p75 = scmp.eq.s32.totalorder %s16, 1
    %p76 = scmp.ne.s32.totalorder %s71, %s73
    %p77 = scmp.eq.s32.totalorder %s16, 0
    %p78 = por %p76, %p77
    %p79 = scmp.ne.s32.totalorder %s71, %s73
    %p80 = scmp.eq.s32.totalorder %s21, 1
    %p81 = por %p79, %p80
    %p82 = scmp.ne.s32.totalorder %s73, %s74
    %p83 = scmp.eq.s32.totalorder %s21, 0
    %p84 = por %p82, %p83
    %p85 = scmp.ne.s32.totalorder %s73, %s74
    %p86 = scmp.eq.s32.totalorder %s22, 1
    %p87 = por %p85, %p86
    %p89 = scmp.ne.s32.totalorder %s74, %s88
    %p90 = scmp.eq.s32.totalorder %s22, 0
    %p91 = por %p89, %p90
    %s93 = sadd.s32 %s92, 1
    %p96 = scmp.eq.s32.totalorder %s16, 1
    %p97 = scmp.ne.s32.totalorder %s92, %s94
    %p98 = scmp.eq.s32.totalorder %s16, 0
    %p99 = por %p97, %p98
    %p100 = scmp.ne.s32.totalorder %s92, %s94
    %p101 = scmp.eq.s32.totalorder %s21, 1
    %p102 = por %p100, %p101
    %p103 = scmp.ne.s32.totalorder %s94, %s95
    %p104 = scmp.eq.s32.totalorder %s21, 0
    %p105 = por %p103, %p104
    %p106 = scmp.ne.s32.totalorder %s94, %s95
    %p107 = scmp.eq.s32.totalorder %s22, 1
    %p108 = por %p106, %p107
    %p110 = scmp.ne.s32.totalorder %s95, %s109
    %p111 = scmp.eq.s32.totalorder %s22, 0
    %p112 = por %p110, %p111
    %s114 = sadd.s32 %s113, 1
    %p117 = scmp.eq.s32.totalorder %s16, 1
    %p118 = scmp.ne.s32.totalorder %s113, %s115
    %p119 = scmp.eq.s32.totalorder %s16, 0
    %p120 = por %p118, %p119
    %p121 = scmp.ne.s32.totalorder %s113, %s115
    %p122 = scmp.eq.s32.totalorder %s21, 1
    %p123 = por %p121, %p122
    %p124 = scmp.ne.s32.totalorder %s115, %s116
    %p125 = scmp.eq.s32.totalorder %s21, 0
    %p126 = por %p124, %p125
    %p127 = scmp.ne.s32.totalorder %s115, %s116
    %p128 = scmp.eq.s32.totalorder %s22, 1
    %p129 = por %p127, %p128
    %p131 = scmp.ne.s32.totalorder %s116, %s130
    %p132 = scmp.eq.s32.totalorder %s22, 0
    %p133 = por %p131, %p132
    %s135 = sadd.s32 %s134, 1
    %p138 = scmp.eq.s32.totalorder %s16, 1
    %p139 = scmp.ne.s32.totalorder %s134, %s136
    %p140 = scmp.eq.s32.totalorder %s16, 0
    %p141 = por %p139, %p140
    %p142 = scmp.ne.s32.totalorder %s134, %s136
    %p143 = scmp.eq.s32.totalorder %s21, 1
    %p144 = por %p142, %p143
    %p145 = scmp.ne.s32.totalorder %s136, %s137
    %p146 = scmp.eq.s32.totalorder %s21, 0
    %p147 = por %p145, %p146
    %p148 = scmp.ne.s32.totalorder %s136, %s137
    %p149 = scmp.eq.s32.totalorder %s22, 1
    %p150 = por %p148, %p149
    %p152 = scmp.ne.s32.totalorder %s137, %s151
    %p153 = scmp.eq.s32.totalorder %s22, 0
    %p154 = por %p152, %p153
    %s156 = sadd.s32 %s155, 1
    %p159 = scmp.eq.s32.totalorder %s16, 1
    %p160 = scmp.ne.s32.totalorder %s155, %s157
    %p161 = scmp.eq.s32.totalorder %s16, 0
    %p162 = por %p160, %p161
    %p163 = scmp.ne.s32.totalorder %s155, %s157
    %p164 = scmp.eq.s32.totalorder %s21, 1
    %p165 = por %p163, %p164
    %p166 = scmp.ne.s32.totalorder %s157, %s158
    %p167 = scmp.eq.s32.totalorder %s21, 0
    %p168 = por %p166, %p167
    %p169 = scmp.ne.s32.totalorder %s157, %s158
    %p170 = scmp.eq.s32.totalorder %s22, 1
    %p171 = por %p169, %p170
    %p173 = scmp.ne.s32.totalorder %s158, %s172
    %p174 = scmp.eq.s32.totalorder %s22, 0
    %p175 = por %p173, %p174
    %s176 = ssub.s32 %s16, %s23
    %p177 = scmp.eq.s32.totalorder %s176, 0
    %s179 = sadd.s32 %s178, 1
    %s180 = scalar_select %p177, %s178, %s179
    %p183 = pneg %p177
    %p184 = scmp.eq.s32.totalorder %s16, 1
    %p185 = por %p183, %p184
    %p186 = scmp.ne.s32.totalorder %s178, %s181
    %p187 = scmp.eq.s32.totalorder %s16, 0
    %p188 = por %p186, %p187
    %p189 = scmp.ne.s32.totalorder %s178, %s181
    %p190 = scmp.eq.s32.totalorder %s21, 1
    %p191 = por %p189, %p190
    %p192 = scmp.ne.s32.totalorder %s181, %s182
    %p193 = scmp.eq.s32.totalorder %s21, 0
    %p194 = por %p192, %p193
    %p195 = scmp.ne.s32.totalorder %s181, %s182
    %p196 = scmp.eq.s32.totalorder %s22, 1
    %p197 = por %p195, %p196
    %p199 = scmp.ne.s32.totalorder %s182, %s198
    %p200 = scmp.eq.s32.totalorder %s22, 0
    %p201 = por %p199, %p200
    %s202 = ssub.s32 %s16, %s23
    %p203 = scmp.eq.s32.totalorder %s202, 0
    %s205 = sadd.s32 %s204, 1
    %s206 = scalar_select %p203, %s204, %s205
    %p209 = pneg %p203
    %p210 = scmp.eq.s32.totalorder %s16, 1
    %p211 = por %p209, %p210
    %p212 = scmp.ne.s32.totalorder %s204, %s207
    %p213 = scmp.eq.s32.totalorder %s16, 0
    %p214 = por %p212, %p213
    %p215 = scmp.ne.s32.totalorder %s204, %s207
    %p216 = scmp.eq.s32.totalorder %s21, 1
    %p217 = por %p215, %p216
    %p218 = scmp.ne.s32.totalorder %s207, %s208
    %p219 = scmp.eq.s32.totalorder %s21, 0
    %p220 = por %p218, %p219
    %p221 = scmp.ne.s32.totalorder %s207, %s208
    %p222 = scmp.eq.s32.totalorder %s22, 1
    %p223 = por %p221, %p222
    %p225 = scmp.ne.s32.totalorder %s208, %s224
    %p226 = scmp.eq.s32.totalorder %s22, 0
    %p227 = por %p225, %p226
    %s228 = ssub.s32 %s16, %s23
    %p229 = scmp.eq.s32.totalorder %s228, 0
    %s231 = sadd.s32 %s230, 1
    %s232 = scalar_select %p229, %s230, %s231
    %p235 = pneg %p229
    %p236 = scmp.eq.s32.totalorder %s16, 1
    %p237 = por %p235, %p236
    %p238 = scmp.ne.s32.totalorder %s230, %s233
    %p239 = scmp.eq.s32.totalorder %s16, 0
    %p240 = por %p238, %p239
    %p241 = scmp.ne.s32.totalorder %s230, %s233
    %p242 = scmp.eq.s32.totalorder %s21, 1
    %p243 = por %p241, %p242
    %p244 = scmp.ne.s32.totalorder %s233, %s234
    %p245 = scmp.eq.s32.totalorder %s21, 0
    %p246 = por %p244, %p245
    %p247 = scmp.ne.s32.totalorder %s233, %s234
    %p248 = scmp.eq.s32.totalorder %s22, 1
    %p249 = por %p247, %p248
    %p251 = scmp.ne.s32.totalorder %s234, %s250
    %p252 = scmp.eq.s32.totalorder %s22, 0
    %p253 = por %p251, %p252
    %p254 = scmp.le.s32.totalorder 1, %s16
    %p255 = scmp.lt.s32.totalorder %s16, 3
    %p256 = pnand %p254, %p255
    %p257 = pneg %p256
    // Predicated region
    $region9: #{tpu_custom_call.1} parent=5 // pred_check
      _
    $region10: #{tpu_custom_call.1} parent=5 // pred_check_branch
      %259 = sbr.rel (%p256) target = $region12
    $region11: #{tpu_custom_call.1} parent=5 // pred_region
      %s260 = ssub.s32 %s16, 1
      // Predicated region
      $region13: #{tpu_custom_call.1} parent=11 // pred_check
        %p261 = pneg %p63
      $region14: #{tpu_custom_call.1} parent=11 // pred_check_branch
        %263 = sbr.rel (%p261) target = $region16
      $region15: #{tpu_custom_call.1} parent=11 // pred_region
        _
      $region16: #{tpu_custom_call.1} parent=11 // pred_fallthru
        _
      // Predicated region
      $region17: #{tpu_custom_call.1} parent=11 // pred_check
        %p264 = pneg %p84
      $region18: #{tpu_custom_call.1} parent=11 // pred_check_branch
        %266 = sbr.rel (%p264) target = $region20
      $region19: #{tpu_custom_call.1} parent=11 // pred_region
        _
      $region20: #{tpu_custom_call.1} parent=11 // pred_fallthru
        _
      // Predicated region
      $region21: #{tpu_custom_call.1} parent=11 // pred_check
        %p267 = pneg %p105
      $region22: #{tpu_custom_call.1} parent=11 // pred_check_branch
        %269 = sbr.rel (%p267) target = $region24
      $region23: #{tpu_custom_call.1} parent=11 // pred_region
        _
      $region24: #{tpu_custom_call.1} parent=11 // pred_fallthru
        _
      // Predicated region
      $region25: #{tpu_custom_call.1} parent=11 // pred_check
        %p270 = pneg %p126
      $region26: #{tpu_custom_call.1} parent=11 // pred_check_branch
        %272 = sbr.rel (%p270) target = $region28
      $region27: #{tpu_custom_call.1} parent=11 // pred_region
        _
      $region28: #{tpu_custom_call.1} parent=11 // pred_fallthru
        _
      // Predicated region
      $region29: #{tpu_custom_call.1} parent=11 // pred_check
        %p273 = pneg %p147
      $region30: #{tpu_custom_call.1} parent=11 // pred_check_branch
        %275 = sbr.rel (%p273) target = $region32
      $region31: #{tpu_custom_call.1} parent=11 // pred_region
        _
      $region32: #{tpu_custom_call.1} parent=11 // pred_fallthru
        _
      // Predicated region
      $region33: #{tpu_custom_call.1} parent=11 // pred_check
        %p276 = pneg %p168
      $region34: #{tpu_custom_call.1} parent=11 // pred_check_branch
        %278 = sbr.rel (%p276) target = $region36
      $region35: #{tpu_custom_call.1} parent=11 // pred_region
        _
      $region36: #{tpu_custom_call.1} parent=11 // pred_fallthru
        _
    $region12: #{tpu_custom_call.1} parent=5 // pred_fallthru
      _
    %p279 = scmp.lt.s32.totalorder %s16, 2
    // Predicated region
    $region37: #{tpu_custom_call.1} parent=5 // pred_check
      %p280 = pneg %p279
    $region38: #{tpu_custom_call.1} parent=5 // pred_check_branch
      %282 = sbr.rel (%p280) target = $region40
    $region39: #{tpu_custom_call.1} parent=5 // pred_region
      // Predicated region
      $region41: #{tpu_custom_call.1} parent=39 // pred_check
        %p283 = pneg %p36
      $region42: #{tpu_custom_call.1} parent=39 // pred_check_branch
        %285 = sbr.rel (%p283) target = $region44
      $region43: #{tpu_custom_call.1} parent=39 // pred_region
        %s286 = smul.u32 16, %s16
        %p287 = scmp.lt.s32.totalorder %s286, 31
        %s288 = scalar_select %p287, %s286, 31
        %s289 = smul.addr %s288, 8
        %s290 = scalar_lea.vmem %s0, %s289
        %s291 = smul.u32 16, %s16
      $region44: #{tpu_custom_call.1} parent=39 // pred_fallthru
        _
    $region40: #{tpu_custom_call.1} parent=5 // pred_fallthru
      _
    %p292 = scmp.le.s32.totalorder 1, %s16
    %p293 = scmp.lt.s32.totalorder %s16, 3
    %p294 = pnand %p292, %p293
    %p295 = pneg %p294
    // Predicated region
    $region45: #{tpu_custom_call.1} parent=5 // pred_check
      _
    $region46: #{tpu_custom_call.1} parent=5 // pred_check_branch
      %297 = sbr.rel (%p294) target = $region48
    $region47: #{tpu_custom_call.1} parent=5 // pred_region
      %s298 = ssub.s32 %s16, 1
      %s299 = smul.u32 16, %s21
      %p300 = scmp.lt.s32.totalorder %s299, 31
      %s301 = scalar_select %p300, %s299, 31
      %s302 = smul.addr %s301, 8
      %s303 = scalar_lea.vmem %s0, %s302
      %p304 = pneg %p42
      %p305 = pneg %p39
      %p306 = pneg %p63
      %p307 = pneg %p60
      %p308 = pneg %p84
      %p309 = pneg %p81
      %p310 = pneg %p105
      %p311 = pneg %p102
      %p312 = pneg %p126
      %p313 = pneg %p123
      %p314 = pneg %p147
      %p315 = pneg %p144
      %p316 = pneg %p168
      %p317 = pneg %p165
      %p318 = pneg %p194
      %p319 = pneg %p191
      %s320 = smul.u32 16, %s21
      %p321 = scmp.lt.s32.totalorder %s320, 31
      %s322 = scalar_select %p321, %s320, 31
      %s323 = smul.addr %s322, 4
      %s324 = scalar_lea.vmem %s7, %s323
      %p325 = pneg %p220
      %p326 = pneg %p217
      %s327 = smul.u32 16, %s21
      %p328 = scmp.lt.s32.totalorder %s327, 31
      %s329 = scalar_select %p328, %s327, 31
      %s330 = smul.addr %s329, 4
      %s331 = scalar_lea.vmem %s8, %s330
      %p332 = pneg %p246
      %p333 = pneg %p243
      %s334 = smul.u32 16, %s21
      %p335 = scmp.lt.s32.totalorder %s334, 31
      %s336 = scalar_select %p335, %s334, 31
      %s337 = smul.addr %s336, 4
      %s338 = scalar_lea.vmem %s9, %s337
      %s339 = smul.u32 16, %s21
      %p340 = scmp.lt.s32.totalorder %s339, 31
      %s341 = scalar_select %p340, %s339, 31
      %s342 = smul.addr %s341, 8
      %s343 = scalar_lea.vmem %s0, %s342
      %s344 = smul.u32 16, %s21
      %s345 = smul.u32 16, %s21
      %p346 = scmp.lt.s32.totalorder %s345, 31
      %s347 = scalar_select %p346, %s345, 31
      %s348 = smul.addr %s347, 4
      %s349 = scalar_lea.vmem %s7, %s348
      %s350 = smul.u32 16, %s21
      %s351 = smul.u32 16, %s21
      %p352 = scmp.lt.s32.totalorder %s351, 31
      %s353 = scalar_select %p352, %s351, 31
      %s354 = smul.addr %s353, 4
      %s355 = scalar_lea.vmem %s8, %s354
      %s356 = smul.u32 16, %s21
      %s357 = smul.u32 16, %s21
      %p358 = scmp.lt.s32.totalorder %s357, 31
      %s359 = scalar_select %p358, %s357, 31
      %s360 = smul.addr %s359, 4
      %s361 = scalar_lea.vmem %s9, %s360
      %s362 = smul.u32 16, %s21
      %v364 = vld [vmem:[%s343] sm:$0xff]
      %v365 = vld [vmem:[%s343 + $0x8] sm:$0xff]
      %v366 = vld [vmem:[%s343 + $0x10] sm:$0xff]
      %v367 = vld [vmem:[%s343 + $0x18] sm:$0xff]
      %v368 = vld [vmem:[%s343 + $0x20] sm:$0xff]
      %v369 = vld [vmem:[%s343 + $0x28] sm:$0xff]
      %v370 = vld [vmem:[%s343 + $0x30] sm:$0xff]
      %v371 = vld [vmem:[%s343 + $0x38] sm:$0xff]
      %v372 = vld [vmem:[%s343 + $0x40] sm:$0xff]
      %v373 = vld [vmem:[%s343 + $0x48] sm:$0xff]
      %v374 = vld [vmem:[%s343 + $0x50] sm:$0xff]
      %v375 = vld [vmem:[%s343 + $0x58] sm:$0xff]
      %v376 = vld [vmem:[%s343 + $0x60] sm:$0xff]
      %v377 = vld [vmem:[%s343 + $0x68] sm:$0xff]
      %v378 = vld [vmem:[%s343 + $0x70] sm:$0xff]
      %v379 = vld [vmem:[%s343 + $0x78] sm:$0xff]
      %v380 = vpack.c.bf16 %v365, %v364
      %v381 = vpack.c.bf16 %v367, %v366
      %v382 = vpack.c.bf16 %v369, %v368
      %v383 = vpack.c.bf16 %v371, %v370
      %v384 = vpack.c.bf16 %v373, %v372
      %v385 = vpack.c.bf16 %v375, %v374
      %v386 = vpack.c.bf16 %v377, %v376
      %v387 = vpack.c.bf16 %v379, %v378
      %v388 = vld [vmem:[%s1] sm:$0xf]
      %v389 = vld [vmem:[%s1 + $0x4] sm:$0xf]
      %v390 = vld [vmem:[%s1 + $0x8] sm:$0xf]
      %v391 = vld [vmem:[%s1 + $0xc] sm:$0xf]
      %v392 = vld [vmem:[%s1 + $0x10] sm:$0xf]
      %v393 = vld [vmem:[%s1 + $0x14] sm:$0xf]
      %v394 = vld [vmem:[%s1 + $0x18] sm:$0xf]
      %v395 = vld [vmem:[%s1 + $0x1c] sm:$0xf]
      %v396 = vld [vmem:[%s4] sm:$0x1]
      %v398 = vperm.slane %v396, 0
      %v408 = vunpack.c.l.b16 %v388
      %v409 = vunpack.c.l.b16 %v389
      %v410 = vunpack.c.l.b16 %v390
      %v411 = vunpack.c.l.b16 %v391
      %v412 = vunpack.c.l.b16 %v392
      %v413 = vunpack.c.l.b16 %v393
      %v414 = vunpack.c.l.b16 %v394
      %v415 = vunpack.c.l.b16 %v395
      %v416 = vpack.c.b16 %v409, %v408
      %v417 = vpack.c.b16 %v411, %v410
      %v418 = vpack.c.b16 %v413, %v412
      %v419 = vpack.c.b16 %v415, %v414
      %vm424 = vcmask 523264
      %v426 = vsel %vm424, %v380, 0
      %v429 = vsel %vm424, %v381, 0
      %v432 = vsel %vm424, %v382, 0
      %v435 = vsel %vm424, %v383, 0
      %v438 = vsel %vm424, %v384, 0
      %v441 = vsel %vm424, %v385, 0
      %v444 = vsel %vm424, %v386, 0
      %v447 = vsel %vm424, %v387, 0
      %449 = vmatpush.bf16.msra.mxu0 0
      %450 = vmatpush.bf16.msra.mxu0 0
      %451 = vmatpush.bf16.msra.mxu0 0
      %452 = vmatpush.bf16.msra.mxu0 0
      %453 = vmatpush.bf16.msra.mxu0 %v419
      %454 = vmatpush.bf16.msra.mxu0 %v418
      %455 = vmatpush.bf16.msra.mxu0 %v417
      %456 = vmatpush.bf16.msra.mxu0 %v416
      %457 = vmatmul.bf16.gmra.mxu0 %v426
      %v458 = vpop.f32.mrf.mxu0
      %v459 = vadd.f32 %v398, %v458
      %v460 = vpop.f32.mrf.mxu0
      %v461 = vadd.f32 %v398, %v460
      %462 = vmatmul.bf16.gmra.mxu0 %v429
      %v463 = vpop.f32.mrf.mxu0
      %v464 = vadd.f32 %v398, %v463
      %v465 = vpop.f32.mrf.mxu0
      %v466 = vadd.f32 %v398, %v465
      %467 = vmatmul.bf16.gmra.mxu0 %v432
      %v468 = vpop.f32.mrf.mxu0
      %v469 = vadd.f32 %v398, %v468
      %v470 = vpop.f32.mrf.mxu0
      %v471 = vadd.f32 %v398, %v470
      %472 = vmatmul.bf16.gmra.mxu0 %v435
      %v473 = vpop.f32.mrf.mxu0
      %v474 = vadd.f32 %v398, %v473
      %v475 = vpop.f32.mrf.mxu0
      %v476 = vadd.f32 %v398, %v475
      %477 = vmatmul.bf16.gmra.mxu0 %v438
      %v478 = vpop.f32.mrf.mxu0
      %v479 = vadd.f32 %v398, %v478
      %v480 = vpop.f32.mrf.mxu0
      %v481 = vadd.f32 %v398, %v480
      %482 = vmatmul.bf16.gmra.mxu0 %v441
      %v483 = vpop.f32.mrf.mxu0
      %v484 = vadd.f32 %v398, %v483
      %v485 = vpop.f32.mrf.mxu0
      %v486 = vadd.f32 %v398, %v485
      %487 = vmatmul.bf16.gmra.mxu0 %v444
      %v488 = vpop.f32.mrf.mxu0
      %v489 = vadd.f32 %v398, %v488
      %v490 = vpop.f32.mrf.mxu0
      %v491 = vadd.f32 %v398, %v490
      %492 = vmatmul.bf16.gmra.mxu0 %v447
      %v493 = vpop.f32.mrf.mxu0
      %v494 = vadd.f32 %v398, %v493
      %v495 = vpop.f32.mrf.mxu0
      %v496 = vadd.f32 %v398, %v495
      %497 = vdwg.mxu0
      %v498 = vpack.c.bf16 %v459, %v459
      %v499 = vpack.c.bf16 %v461, %v461
      %v500 = vpack.c.bf16 %v464, %v464
      %v501 = vpack.c.bf16 %v466, %v466
      %v502 = vpack.c.bf16 %v469, %v469
      %v503 = vpack.c.bf16 %v471, %v471
      %v504 = vpack.c.bf16 %v474, %v474
      %v505 = vpack.c.bf16 %v476, %v476
      %v506 = vpack.c.bf16 %v479, %v479
      %v507 = vpack.c.bf16 %v481, %v481
      %v508 = vpack.c.bf16 %v484, %v484
      %v509 = vpack.c.bf16 %v486, %v486
      %v510 = vpack.c.bf16 %v489, %v489
      %v511 = vpack.c.bf16 %v491, %v491
      %v512 = vpack.c.bf16 %v494, %v494
      %v513 = vpack.c.bf16 %v496, %v496
      %vm514 = vcmask 519168
      %515 = vst.msk [vmem:[%s349] sm:$0xf] %vm514, %v498
      %516 = vst.msk [vmem:[%s349 + $0x4] sm:$0xf] %vm514, %v499
      %517 = vst.msk [vmem:[%s349 + $0x8] sm:$0xf] %vm514, %v500
      %518 = vst.msk [vmem:[%s349 + $0xc] sm:$0xf] %vm514, %v501
      %519 = vst.msk [vmem:[%s349 + $0x10] sm:$0xf] %vm514, %v502
      %520 = vst.msk [vmem:[%s349 + $0x14] sm:$0xf] %vm514, %v503
      %521 = vst.msk [vmem:[%s349 + $0x18] sm:$0xf] %vm514, %v504
      %522 = vst.msk [vmem:[%s349 + $0x1c] sm:$0xf] %vm514, %v505
      %523 = vst.msk [vmem:[%s349 + $0x20] sm:$0xf] %vm514, %v506
      %524 = vst.msk [vmem:[%s349 + $0x24] sm:$0xf] %vm514, %v507
      %525 = vst.msk [vmem:[%s349 + $0x28] sm:$0xf] %vm514, %v508
      %526 = vst.msk [vmem:[%s349 + $0x2c] sm:$0xf] %vm514, %v509
      %527 = vst.msk [vmem:[%s349 + $0x30] sm:$0xf] %vm514, %v510
      %528 = vst.msk [vmem:[%s349 + $0x34] sm:$0xf] %vm514, %v511
      %529 = vst.msk [vmem:[%s349 + $0x38] sm:$0xf] %vm514, %v512
      %530 = vst.msk [vmem:[%s349 + $0x3c] sm:$0xf] %vm514, %v513
      %v531 = vld [vmem:[%s2] sm:$0xf]
      %v532 = vld [vmem:[%s2 + $0x4] sm:$0xf]
      %v533 = vld [vmem:[%s2 + $0x8] sm:$0xf]
      %v534 = vld [vmem:[%s2 + $0xc] sm:$0xf]
      %v535 = vld [vmem:[%s2 + $0x10] sm:$0xf]
      %v536 = vld [vmem:[%s2 + $0x14] sm:$0xf]
      %v537 = vld [vmem:[%s2 + $0x18] sm:$0xf]
      %v538 = vld [vmem:[%s2 + $0x1c] sm:$0xf]
      %v539 = vld [vmem:[%s5] sm:$0x1]
      %v541 = vperm.slane %v539, 0
      %v551 = vunpack.c.l.b16 %v531
      %v552 = vunpack.c.l.b16 %v532
      %v553 = vunpack.c.l.b16 %v533
      %v554 = vunpack.c.l.b16 %v534
      %v555 = vunpack.c.l.b16 %v535
      %v556 = vunpack.c.l.b16 %v536
      %v557 = vunpack.c.l.b16 %v537
      %v558 = vunpack.c.l.b16 %v538
      %v559 = vpack.c.b16 %v552, %v551
      %v560 = vpack.c.b16 %v554, %v553
      %v561 = vpack.c.b16 %v556, %v555
      %v562 = vpack.c.b16 %v558, %v557
      %567 = vmatpush.bf16.msra.mxu0 0
      %568 = vmatpush.bf16.msra.mxu0 0
      %569 = vmatpush.bf16.msra.mxu0 0
      %570 = vmatpush.bf16.msra.mxu0 0
      %571 = vmatpush.bf16.msra.mxu0 %v562
      %572 = vmatpush.bf16.msra.mxu0 %v561
      %573 = vmatpush.bf16.msra.mxu0 %v560
      %574 = vmatpush.bf16.msra.mxu0 %v559
      %575 = vmatmul.bf16.gmra.mxu0 %v426
      %v576 = vpop.f32.mrf.mxu0
      %v577 = vadd.f32 %v541, %v576
      %v578 = vpop.f32.mrf.mxu0
      %v579 = vadd.f32 %v541, %v578
      %580 = vmatmul.bf16.gmra.mxu0 %v429
      %v581 = vpop.f32.mrf.mxu0
      %v582 = vadd.f32 %v541, %v581
      %v583 = vpop.f32.mrf.mxu0
      %v584 = vadd.f32 %v541, %v583
      %585 = vmatmul.bf16.gmra.mxu0 %v432
      %v586 = vpop.f32.mrf.mxu0
      %v587 = vadd.f32 %v541, %v586
      %v588 = vpop.f32.mrf.mxu0
      %v589 = vadd.f32 %v541, %v588
      %590 = vmatmul.bf16.gmra.mxu0 %v435
      %v591 = vpop.f32.mrf.mxu0
      %v592 = vadd.f32 %v541, %v591
      %v593 = vpop.f32.mrf.mxu0
      %v594 = vadd.f32 %v541, %v593
      %595 = vmatmul.bf16.gmra.mxu0 %v438
      %v596 = vpop.f32.mrf.mxu0
      %v597 = vadd.f32 %v541, %v596
      %v598 = vpop.f32.mrf.mxu0
      %v599 = vadd.f32 %v541, %v598
      %600 = vmatmul.bf16.gmra.mxu0 %v441
      %v601 = vpop.f32.mrf.mxu0
      %v602 = vadd.f32 %v541, %v601
      %v603 = vpop.f32.mrf.mxu0
      %v604 = vadd.f32 %v541, %v603
      %605 = vmatmul.bf16.gmra.mxu0 %v444
      %v606 = vpop.f32.mrf.mxu0
      %v607 = vadd.f32 %v541, %v606
      %v608 = vpop.f32.mrf.mxu0
      %v609 = vadd.f32 %v541, %v608
      %610 = vmatmul.bf16.gmra.mxu0 %v447
      %v611 = vpop.f32.mrf.mxu0
      %v612 = vadd.f32 %v541, %v611
      %v613 = vpop.f32.mrf.mxu0
      %v614 = vadd.f32 %v541, %v613
      %615 = vdwg.mxu0
      %v616 = vpack.c.bf16 %v577, %v577
      %v617 = vpack.c.bf16 %v579, %v579
      %v618 = vpack.c.bf16 %v582, %v582
      %v619 = vpack.c.bf16 %v584, %v584
      %v620 = vpack.c.bf16 %v587, %v587
      %v621 = vpack.c.bf16 %v589, %v589
      %v622 = vpack.c.bf16 %v592, %v592
      %v623 = vpack.c.bf16 %v594, %v594
      %v624 = vpack.c.bf16 %v597, %v597
      %v625 = vpack.c.bf16 %v599, %v599
      %v626 = vpack.c.bf16 %v602, %v602
      %v627 = vpack.c.bf16 %v604, %v604
      %v628 = vpack.c.bf16 %v607, %v607
      %v629 = vpack.c.bf16 %v609, %v609
      %v630 = vpack.c.bf16 %v612, %v612
      %v631 = vpack.c.bf16 %v614, %v614
      %632 = vst.msk [vmem:[%s355] sm:$0xf] %vm514, %v616
      %633 = vst.msk [vmem:[%s355 + $0x4] sm:$0xf] %vm514, %v617
      %634 = vst.msk [vmem:[%s355 + $0x8] sm:$0xf] %vm514, %v618
      %635 = vst.msk [vmem:[%s355 + $0xc] sm:$0xf] %vm514, %v619
      %636 = vst.msk [vmem:[%s355 + $0x10] sm:$0xf] %vm514, %v620
      %637 = vst.msk [vmem:[%s355 + $0x14] sm:$0xf] %vm514, %v621
      %638 = vst.msk [vmem:[%s355 + $0x18] sm:$0xf] %vm514, %v622
      %639 = vst.msk [vmem:[%s355 + $0x1c] sm:$0xf] %vm514, %v623
      %640 = vst.msk [vmem:[%s355 + $0x20] sm:$0xf] %vm514, %v624
      %641 = vst.msk [vmem:[%s355 + $0x24] sm:$0xf] %vm514, %v625
      %642 = vst.msk [vmem:[%s355 + $0x28] sm:$0xf] %vm514, %v626
      %643 = vst.msk [vmem:[%s355 + $0x2c] sm:$0xf] %vm514, %v627
      %644 = vst.msk [vmem:[%s355 + $0x30] sm:$0xf] %vm514, %v628
      %645 = vst.msk [vmem:[%s355 + $0x34] sm:$0xf] %vm514, %v629
      %646 = vst.msk [vmem:[%s355 + $0x38] sm:$0xf] %vm514, %v630
      %647 = vst.msk [vmem:[%s355 + $0x3c] sm:$0xf] %vm514, %v631
      %v648 = vld [vmem:[%s3] sm:$0xf]
      %v649 = vld [vmem:[%s3 + $0x4] sm:$0xf]
      %v650 = vld [vmem:[%s3 + $0x8] sm:$0xf]
      %v651 = vld [vmem:[%s3 + $0xc] sm:$0xf]
      %v652 = vld [vmem:[%s3 + $0x10] sm:$0xf]
      %v653 = vld [vmem:[%s3 + $0x14] sm:$0xf]
      %v654 = vld [vmem:[%s3 + $0x18] sm:$0xf]
      %v655 = vld [vmem:[%s3 + $0x1c] sm:$0xf]
      %v656 = vld [vmem:[%s6] sm:$0x1]
      %v658 = vperm.slane %v656, 0
      %v668 = vunpack.c.l.b16 %v648
      %v669 = vunpack.c.l.b16 %v649
      %v670 = vunpack.c.l.b16 %v650
      %v671 = vunpack.c.l.b16 %v651
      %v672 = vunpack.c.l.b16 %v652
      %v673 = vunpack.c.l.b16 %v653
      %v674 = vunpack.c.l.b16 %v654
      %v675 = vunpack.c.l.b16 %v655
      %v676 = vpack.c.b16 %v669, %v668
      %v677 = vpack.c.b16 %v671, %v670
      %v678 = vpack.c.b16 %v673, %v672
      %v679 = vpack.c.b16 %v675, %v674
      %684 = vmatpush.bf16.msra.mxu0 0
      %685 = vmatpush.bf16.msra.mxu0 0
      %686 = vmatpush.bf16.msra.mxu0 0
      %687 = vmatpush.bf16.msra.mxu0 0
      %688 = vmatpush.bf16.msra.mxu0 %v679
      %689 = vmatpush.bf16.msra.mxu0 %v678
      %690 = vmatpush.bf16.msra.mxu0 %v677
      %691 = vmatpush.bf16.msra.mxu0 %v676
      %692 = vmatmul.bf16.gmra.mxu0 %v426
      %v693 = vpop.f32.mrf.mxu0
      %v694 = vadd.f32 %v658, %v693
      %v695 = vpop.f32.mrf.mxu0
      %v696 = vadd.f32 %v658, %v695
      %697 = vmatmul.bf16.gmra.mxu0 %v429
      %v698 = vpop.f32.mrf.mxu0
      %v699 = vadd.f32 %v658, %v698
      %v700 = vpop.f32.mrf.mxu0
      %v701 = vadd.f32 %v658, %v700
      %702 = vmatmul.bf16.gmra.mxu0 %v432
      %v703 = vpop.f32.mrf.mxu0
      %v704 = vadd.f32 %v658, %v703
      %v705 = vpop.f32.mrf.mxu0
      %v706 = vadd.f32 %v658, %v705
      %707 = vmatmul.bf16.gmra.mxu0 %v435
      %v708 = vpop.f32.mrf.mxu0
      %v709 = vadd.f32 %v658, %v708
      %v710 = vpop.f32.mrf.mxu0
      %v711 = vadd.f32 %v658, %v710
      %712 = vmatmul.bf16.gmra.mxu0 %v438
      %v713 = vpop.f32.mrf.mxu0
      %v714 = vadd.f32 %v658, %v713
      %v715 = vpop.f32.mrf.mxu0
      %v716 = vadd.f32 %v658, %v715
      %717 = vmatmul.bf16.gmra.mxu0 %v441
      %v718 = vpop.f32.mrf.mxu0
      %v719 = vadd.f32 %v658, %v718
      %v720 = vpop.f32.mrf.mxu0
      %v721 = vadd.f32 %v658, %v720
      %722 = vmatmul.bf16.gmra.mxu0 %v444
      %v723 = vpop.f32.mrf.mxu0
      %v724 = vadd.f32 %v658, %v723
      %v725 = vpop.f32.mrf.mxu0
      %v726 = vadd.f32 %v658, %v725
      %727 = vmatmul.bf16.gmra.mxu0 %v447
      %v728 = vpop.f32.mrf.mxu0
      %v729 = vadd.f32 %v658, %v728
      %v730 = vpop.f32.mrf.mxu0
      %v731 = vadd.f32 %v658, %v730
      %732 = vdwg.mxu0
      %v733 = vpack.c.bf16 %v694, %v694
      %v734 = vpack.c.bf16 %v696, %v696
      %v735 = vpack.c.bf16 %v699, %v699
      %v736 = vpack.c.bf16 %v701, %v701
      %v737 = vpack.c.bf16 %v704, %v704
      %v738 = vpack.c.bf16 %v706, %v706
      %v739 = vpack.c.bf16 %v709, %v709
      %v740 = vpack.c.bf16 %v711, %v711
      %v741 = vpack.c.bf16 %v714, %v714
      %v742 = vpack.c.bf16 %v716, %v716
      %v743 = vpack.c.bf16 %v719, %v719
      %v744 = vpack.c.bf16 %v721, %v721
      %v745 = vpack.c.bf16 %v724, %v724
      %v746 = vpack.c.bf16 %v726, %v726
      %v747 = vpack.c.bf16 %v729, %v729
      %v748 = vpack.c.bf16 %v731, %v731
      %749 = vst.msk [vmem:[%s361] sm:$0xf] %vm514, %v733
      %750 = vst.msk [vmem:[%s361 + $0x4] sm:$0xf] %vm514, %v734
      %751 = vst.msk [vmem:[%s361 + $0x8] sm:$0xf] %vm514, %v735
      %752 = vst.msk [vmem:[%s361 + $0xc] sm:$0xf] %vm514, %v736
      %753 = vst.msk [vmem:[%s361 + $0x10] sm:$0xf] %vm514, %v737
      %754 = vst.msk [vmem:[%s361 + $0x14] sm:$0xf] %vm514, %v738
      %755 = vst.msk [vmem:[%s361 + $0x18] sm:$0xf] %vm514, %v739
      %756 = vst.msk [vmem:[%s361 + $0x1c] sm:$0xf] %vm514, %v740
      %757 = vst.msk [vmem:[%s361 + $0x20] sm:$0xf] %vm514, %v741
      %758 = vst.msk [vmem:[%s361 + $0x24] sm:$0xf] %vm514, %v742
      %759 = vst.msk [vmem:[%s361 + $0x28] sm:$0xf] %vm514, %v743
      %760 = vst.msk [vmem:[%s361 + $0x2c] sm:$0xf] %vm514, %v744
      %761 = vst.msk [vmem:[%s361 + $0x30] sm:$0xf] %vm514, %v745
      %762 = vst.msk [vmem:[%s361 + $0x34] sm:$0xf] %vm514, %v746
      %763 = vst.msk [vmem:[%s361 + $0x38] sm:$0xf] %vm514, %v747
      %764 = vst.msk [vmem:[%s361 + $0x3c] sm:$0xf] %vm514, %v748
      %s765 = smul.u32 16, %s21
      %p766 = scmp.lt.s32.totalorder %s765, 31
      %s767 = scalar_select %p766, %s765, 31
      %s768 = smul.addr %s767, 4
      %s769 = scalar_lea.vmem %s7, %s768
      %s770 = smul.u32 16, %s21
      %p771 = scmp.lt.s32.totalorder %s770, 31
      %s772 = scalar_select %p771, %s770, 31
      %s773 = smul.addr %s772, 4
      %s774 = scalar_lea.vmem %s8, %s773
      %s775 = smul.u32 16, %s21
      %p776 = scmp.lt.s32.totalorder %s775, 31
      %s777 = scalar_select %p776, %s775, 31
      %s778 = smul.addr %s777, 4
      %s779 = scalar_lea.vmem %s9, %s778
      // Predicated region
      $region49: #{tpu_custom_call.1} parent=47 // pred_check
        %p780 = pneg %p191
      $region50: #{tpu_custom_call.1} parent=47 // pred_check_branch
        %782 = sbr.rel (%p780) target = $region52
      $region51: #{tpu_custom_call.1} parent=47 // pred_region
        %s783 = smul.u32 16, %s21
      $region52: #{tpu_custom_call.1} parent=47 // pred_fallthru
        _
      // Predicated region
      $region53: #{tpu_custom_call.1} parent=47 // pred_check
        %p784 = pneg %p217
      $region54: #{tpu_custom_call.1} parent=47 // pred_check_branch
        %786 = sbr.rel (%p784) target = $region56
      $region55: #{tpu_custom_call.1} parent=47 // pred_region
        %s787 = smul.u32 16, %s21
      $region56: #{tpu_custom_call.1} parent=47 // pred_fallthru
        _
      // Predicated region
      $region57: #{tpu_custom_call.1} parent=47 // pred_check
        %p788 = pneg %p243
      $region58: #{tpu_custom_call.1} parent=47 // pred_check_branch
        %790 = sbr.rel (%p788) target = $region60
      $region59: #{tpu_custom_call.1} parent=47 // pred_region
        %s791 = smul.u32 16, %s21
      $region60: #{tpu_custom_call.1} parent=47 // pred_fallthru
        _
    $region48: #{tpu_custom_call.1} parent=5 // pred_fallthru
      _
    %p792 = scmp.le.s32.totalorder 2, %s16
    // Predicated region
    $region61: #{tpu_custom_call.1} parent=5 // pred_check
      %p793 = pneg %p792
    $region62: #{tpu_custom_call.1} parent=5 // pred_check_branch
      %795 = sbr.rel (%p793) target = $region64
    $region63: #{tpu_custom_call.1} parent=5 // pred_region
      %s796 = ssub.s32 %s16, 2
      // Predicated region
      $region65: #{tpu_custom_call.1} parent=63 // pred_check
        %p797 = pneg %p197
      $region66: #{tpu_custom_call.1} parent=63 // pred_check_branch
        %799 = sbr.rel (%p797) target = $region68
      $region67: #{tpu_custom_call.1} parent=63 // pred_region
        %s800 = smul.u32 16, %s22
        %p801 = scmp.lt.s32.totalorder %s800, 31
        %s802 = scalar_select %p801, %s800, 31
        %s803 = smul.addr %s802, 4
        %s804 = scalar_lea.vmem %s7, %s803
      $region68: #{tpu_custom_call.1} parent=63 // pred_fallthru
        _
      // Predicated region
      $region69: #{tpu_custom_call.1} parent=63 // pred_check
        %p805 = pneg %p223
      $region70: #{tpu_custom_call.1} parent=63 // pred_check_branch
        %807 = sbr.rel (%p805) target = $region72
      $region71: #{tpu_custom_call.1} parent=63 // pred_region
        %s808 = smul.u32 16, %s22
        %p809 = scmp.lt.s32.totalorder %s808, 31
        %s810 = scalar_select %p809, %s808, 31
        %s811 = smul.addr %s810, 4
        %s812 = scalar_lea.vmem %s8, %s811
      $region72: #{tpu_custom_call.1} parent=63 // pred_fallthru
        _
      // Predicated region
      $region73: #{tpu_custom_call.1} parent=63 // pred_check
        %p813 = pneg %p249
      $region74: #{tpu_custom_call.1} parent=63 // pred_check_branch
        %815 = sbr.rel (%p813) target = $region76
      $region75: #{tpu_custom_call.1} parent=63 // pred_region
        %s816 = smul.u32 16, %s22
        %p817 = scmp.lt.s32.totalorder %s816, 31
        %s818 = scalar_select %p817, %s816, 31
        %s819 = smul.addr %s818, 4
        %s820 = scalar_lea.vmem %s9, %s819
      $region76: #{tpu_custom_call.1} parent=63 // pred_fallthru
        _
    $region64: #{tpu_custom_call.1} parent=5 // pred_fallthru
      _
  $region6: #{tpu_custom_call.1} parent=0 // loop_footer
    %s20 = sadd.s32 1, %s16
  $region7: #{tpu_custom_call.1} parent=0 // loop_footer_branch
    %15 = sbr.rel target = $region3
  $region8: #{tpu_custom_call.1} parent=0 // loop_exit
    _

</llo_original>
